<compile_context>
chip_gen: v7x
topology: tpu7x:2x2x1
jax: 0.10.0
libtpu: 0.0.40
codegen_flags: <defaults>
</compile_context>

<pallas_src>
import jax
import jax.numpy as jnp
from jax.experimental import pallas as pl
from jax.experimental.pallas import tpu as pltpu


def _pick_tile(HW, max_lanes):
    """Largest lane tile that divides HW, is a multiple of 128 (lane-dense
    stores) and <= max_lanes; capped at HW//2 so there are >=2 spatial tiles
    whenever the image is large enough to split (pipeline depth at small B)."""
    limit = min(max_lanes, max(128, HW // 2))
    best = None
    t = 128
    while t <= min(HW, limit):
        if HW % t == 0:
            best = t
        t += 128
    if best is None:
        # TODO(synk): no 128-multiple divisor of HW <= limit; fall back to one
        # full-width tile (block == full array dims, still compiles, but the
        # lane-dense / pipelined tiling degrades for such shapes).
        return HW
    return best


def _make_kernel(Cin, Cout, W, TW, PADL):
    WIN = TW + 2 * PADL          # halo window width covering all 9 taps

    def kernel(xp_ref, wf_ref, b_ref, out_ref):
        t = pl.program_id(1)
        base = t * TW
        if TW % 128 == 0:
            base = pl.multiple_of(base, 128)

        # One aligned dynamic load of this tile's halo window; every tap is a
        # static lane slice of it (no per-tile staging scratch, no VMEM copy of
        # the whole image).
        win = xp_ref[0, :, pl.ds(base, WIN)]                 # (Cin, WIN)

        # Absolute column-in-row of each output lane (valid for any TW vs W).
        col = (base + jax.lax.broadcasted_iota(jnp.int32, (1, TW), 1)) % W
        not_left = col >= 1          # a dw = -1 source column exists
        not_right = col <= W - 2     # a dw = +1 source column exists

        def tap(dh, dw):
            off = PADL + dh * W + dw                         # static, >= 0
            return win[:, off:off + TW]                      # (Cin, TW)

        zero = jnp.zeros((), win.dtype)
        # Group taps by horizontal shift so each boundary mask is applied once.
        left = jnp.where(not_left,
                         jnp.concatenate([tap(-1, -1), tap(0, -1), tap(1, -1)], axis=0),
                         zero)
        ctr = jnp.concatenate([tap(-1, 0), tap(0, 0), tap(1, 0)], axis=0)
        right = jnp.where(not_right,
                          jnp.concatenate([tap(-1, 1), tap(0, 1), tap(1, 1)], axis=0),
                          zero)
        rhs = jnp.concatenate([left, ctr, right], axis=0)    # (9*Cin, TW)

        # Single fused MXU matmul: depthwise(3x3) -> BN1 -> pointwise(1x1) -> BN2
        # plus the 1x1 shortcut (folded into the centre-tap weight column).
        z = jnp.dot(wf_ref[...], rhs, preferred_element_type=jnp.float32)  # (Cout, TW)
        out_ref[0] = (z + b_ref[...]).astype(out_ref.dtype)

    return kernel


def depthwise_res_block(x_nchw, params, eps=1e-5, mxu_dtype=jnp.bfloat16):
    """Forward pass of DepthwiseResBlock (eval-mode BN).  Input/output NCHW.

    mxu_dtype: dtype of the MXU operands (activations + fused weight);
    accumulation is always f32.  Pass None / jnp.float32 for full precision.
    """
    B, Cin, H, W = x_nchw.shape
    HW = H * W
    mm = jnp.dtype(jnp.float32 if mxu_dtype is None else mxu_dtype)

    # ---- fold conv biases + inference BatchNorm into one weight / one bias ---
    scale1 = params["bn1_g"] * jax.lax.rsqrt(params["bn1_v"] + eps)           # (Cin,)
    w_dw = params["dw_w"][:, 0] * scale1[:, None, None]                       # (Cin,3,3)
    b1 = scale1 * (params["dw_b"] - params["bn1_m"]) + params["bn1_b"]        # (Cin,)

    scale2 = params["bn2_g"] * jax.lax.rsqrt(params["bn2_v"] + eps)           # (Cout,)
    w_pw = params["pw_w"][:, :, 0, 0] * scale2[:, None]                       # (Cout,Cin)
    Cout = w_pw.shape[0]
    w_sc = params["sc_w"][:, :, 0, 0]                                         # (Cout,Cin)

    # One (Cout, 9*Cin) matrix: pointwise∘depthwise collapsed per tap, shortcut
    # folded into the centre tap.  Tap order: dw in (-1,0,+1), dh in (-1,0,+1),
    # matching the kernel's RHS stacking order.
    blocks = []
    for kw in range(3):
        for kh in range(3):
            wk = w_pw * w_dw[:, kh, kw][None, :]
            if kh == 1 and kw == 1:
                wk = wk + w_sc
            blocks.append(wk)
    w_fused = jnp.concatenate(blocks, axis=1).astype(mm)                      # (Cout, 9*Cin)

    b_out = (w_pw @ b1
             + scale2 * (params["pw_b"] - params["bn2_m"]) + params["bn2_b"]
             + params["sc_b"]).astype(jnp.float32).reshape(Cout, 1)           # (Cout, 1)

    # ---- zero-pad the flattened spatial axis once (fused with the MXU cast) --
    # PADL is rounded up to a multiple of 128 so the per-tile window base is a
    # 128-aligned lane offset.
    PADL = int(pl.cdiv(W + 1, 128)) * 128
    HWP = HW + 2 * PADL
    x_pad = jnp.pad(x_nchw.reshape(B, Cin, HW).astype(mm),
                    ((0, 0), (0, 0), (PADL, PADL)))

    TW = _pick_tile(HW, max_lanes=1024 if mm == jnp.dtype(jnp.float32) else 2048)
    nT = HW // TW

    # ---- explicit VMEM budget (double-buffered blocks + weights + RHS slack) -
    msz = mm.itemsize
    osz = jnp.dtype(x_nchw.dtype).itemsize
    need = (2 * Cin * HWP * msz                   # resident padded activations
            + 2 * 9 * Cin * max(Cout, 8) * msz    # fused weight
            + 2 * max(Cout, 8) * 128 * 4          # bias (padded to a lane tile)
            + 2 * max(Cout, 8) * TW * osz         # output tile
            + 4 * 9 * Cin * TW * msz)             # in-kernel window / RHS slack
    vmem_limit = max(16 << 20, min(int(need * 1.5) + (2 << 20), 96 << 20))
    # TODO(synk): for very large Cin*H*W (v7x: 64 MiB physical VMEM) replace the
    # whole-image-resident input block with a manual double-buffered row-band
    # DMA pipeline (memory_space=pl.ANY + pltpu.make_async_copy).

    kernel = _make_kernel(Cin, Cout, W, TW, PADL)

    out_flat = pl.pallas_call(
        kernel,
        out_shape=jax.ShapeDtypeStruct((B, Cout, HW), x_nchw.dtype),
        grid_spec=pltpu.PrefetchScalarGridSpec(
            num_scalar_prefetch=0,
            grid=(B, nT),
            in_specs=[
                # whole padded image per batch element; same block index for
                # every spatial tile, so it is DMA'd once per batch element.
                pl.BlockSpec((1, Cin, HWP), lambda b, t: (b, 0, 0)),
                pl.BlockSpec((Cout, 9 * Cin), lambda b, t: (0, 0)),
                pl.BlockSpec((Cout, 1), lambda b, t: (0, 0)),
            ],
            out_specs=pl.BlockSpec((1, Cout, TW), lambda b, t: (b, 0, t)),
        ),
        compiler_params=pltpu.CompilerParams(
            # no cross-tile scratch dependence -> both axes can shard (v7x 2xTC)
            dimension_semantics=("parallel", "parallel"),
            vmem_limit_bytes=vmem_limit),
    )(x_pad, w_fused, b_out)

    return out_flat.reshape(B, Cout, H, W)


def _reference(x_nchw, params, eps=1e-5):
    """Pure-JAX reference (module semantics, no folding) for a sanity check."""
    B, Cin, H, W = x_nchw.shape
    x = jnp.transpose(x_nchw, (0, 2, 3, 1)).astype(jnp.float32)      # NHWC
    xp = jnp.pad(x, ((0, 0), (1, 1), (1, 1), (0, 0)))
    w_dw = jnp.transpose(params["dw_w"][:, 0], (1, 2, 0))
    dw = jnp.zeros((B, H, W, Cin), jnp.float32)
    for kh in range(3):
        for kw in range(3):
            dw = dw + xp[:, kh:kh + H, kw:kw + W, :] * w_dw[kh, kw]
    dw = dw + params["dw_b"]
    bn1 = params["bn1_g"] * (dw - params["bn1_m"]) / jnp.sqrt(params["bn1_v"] + eps) + params["bn1_b"]
    pw = jnp.einsum("bhwc,oc->bhwo", bn1, params["pw_w"][:, :, 0, 0]) + params["pw_b"]
    bn2 = params["bn2_g"] * (pw - params["bn2_m"]) / jnp.sqrt(params["bn2_v"] + eps) + params["bn2_b"]
    sc = jnp.einsum("bhwc,oc->bhwo", x, params["sc_w"][:, :, 0, 0]) + params["sc_b"]
    return jnp.transpose(bn2 + sc, (0, 3, 1, 2))


def _init_params(key, in_channels, out_channels):
    ks = jax.random.split(key, 8)
    return {
        "dw_w": 0.1 * jax.random.normal(ks[0], (in_channels, 1, 3, 3), jnp.float32),
        "dw_b": 0.1 * jax.random.normal(ks[1], (in_channels,), jnp.float32),
        "bn1_g": 1.0 + 0.1 * jax.random.normal(ks[2], (in_channels,), jnp.float32),
        "bn1_b": 0.1 * jax.random.normal(ks[3], (in_channels,), jnp.float32),
        "bn1_m": 0.05 * jax.random.normal(ks[2], (in_channels,), jnp.float32),
        "bn1_v": 1.0 + 0.1 * jax.random.uniform(ks[3], (in_channels,), jnp.float32),
        "pw_w": 0.1 * jax.random.normal(ks[4], (out_channels, in_channels, 1, 1), jnp.float32),
        "pw_b": 0.1 * jax.random.normal(ks[5], (out_channels,), jnp.float32),
        "bn2_g": 1.0 + 0.1 * jax.random.normal(ks[6], (out_channels,), jnp.float32),
        "bn2_b": 0.1 * jax.random.normal(ks[7], (out_channels,), jnp.float32),
        "bn2_m": 0.05 * jax.random.normal(ks[6], (out_channels,), jnp.float32),
        "bn2_v": 1.0 + 0.1 * jax.random.uniform(ks[7], (out_channels,), jnp.float32),
        "sc_w": 0.1 * jax.random.normal(ks[0], (out_channels, in_channels, 1, 1), jnp.float32),
        "sc_b": 0.1 * jax.random.normal(ks[1], (out_channels,), jnp.float32),
    }


if __name__ == "__main__":
    B, Cin, Cout, H, W = 2, 4, 8, 16, 16
    key = jax.random.PRNGKey(0)
    kx, kp = jax.random.split(key)
    x = jax.random.normal(kx, (B, Cin, H, W), jnp.float32)
    params = _init_params(kp, Cin, Cout)

    ref = _reference(x, params)

    # Full-precision MXU operands: tight check of the fused-weight math.
    out_f32 = jax.block_until_ready(depthwise_res_block(x, params, mxu_dtype=jnp.float32))
    assert out_f32.shape == (B, Cout, H, W)
    assert jnp.allclose(out_f32, ref, atol=2e-3, rtol=2e-3), "f32 mismatch vs JAX reference"

    # Default fast path: bf16 MXU operands, f32 accumulation (looser tolerance).
    out = jax.block_until_ready(depthwise_res_block(x, params))
    assert out.shape == (B, Cout, H, W)
    assert jnp.allclose(out, ref, atol=3e-2, rtol=3e-2), "bf16 mismatch vs JAX reference"

    print("KERNEL_OK")
</pallas_src>

<mosaic_0001>
module attributes {stable_mosaic.version = 11 : i64} {
  func.func @kernel(%arg0: i32, %arg1: i32, %arg2: memref<1x4x512xf32, #tpu.memory_space<vmem>>, %arg3: memref<8x36xf32, #tpu.memory_space<vmem>>, %arg4: memref<8x1xf32, #tpu.memory_space<vmem>>, %arg5: memref<1x8x128xf32, #tpu.memory_space<vmem>>) attributes {dimension_semantics = [#tpu.dimension_semantics<parallel>, #tpu.dimension_semantics<parallel>], iteration_bounds = array<i64: 2, 2>, scalar_prefetch = 0 : i64, scratch_operands = 0 : i64, tpu.core_type = #tpu.core_type<tc>, window_params = [{transform_indices = @transform_0, window_bounds = array<i64: 1, 4, 512>}, {pipeline_mode = #tpu.pipeline_mode<synchronous>, transform_indices = @transform_1, window_bounds = array<i64: 8, 36>}, {pipeline_mode = #tpu.pipeline_mode<synchronous>, transform_indices = @transform_2, window_bounds = array<i64: 8, 1>}, {transform_indices = @transform_3, window_bounds = array<i64: 1, 8, 128>}]} {
    %c128_i32 = arith.constant 128 : i32
    %0 = arith.muli %arg1, %c128_i32 : i32
    %1 = tpu.assume_multiple %0, 128 : i32
    %c0 = arith.constant 0 : index
    %c0_0 = arith.constant 0 : index
    %2 = arith.index_cast %1 : i32 to index
    %3 = vector.load %arg2[%c0, %c0_0, %2] : memref<1x4x512xf32, #tpu.memory_space<vmem>>, vector<1x4x384xf32>
    %4 = vector.shape_cast %3 : vector<1x4x384xf32> to vector<4x384xf32>
    %5 = tpu.iota {dimensions = array<i32: 1>} : vector<1x128xi32>
    %6 = vector.broadcast %1 : i32 to vector<1x128xi32>
    %7 = arith.addi %6, %5 : vector<1x128xi32>
    %c16_i32 = arith.constant 16 : i32
    %c0_i32 = arith.constant 0 : i32
    %8 = arith.cmpi eq, %c16_i32, %c0_i32 : i32
    %c1_i32 = arith.constant 1 : i32
    %9 = arith.select %8, %c1_i32, %c16_i32 : i32
    %10 = vector.broadcast %9 : i32 to vector<1x128xi32>
    %11 = arith.remsi %7, %10 : vector<1x128xi32>
    %c0_i32_1 = arith.constant 0 : i32
    %12 = vector.broadcast %c0_i32_1 : i32 to vector<1x128xi32>
    %13 = arith.cmpi ne, %11, %12 : vector<1x128xi32>
    %c0_i32_2 = arith.constant 0 : i32
    %14 = vector.broadcast %c0_i32_2 : i32 to vector<1x128xi32>
    %15 = arith.cmpi slt, %11, %14 : vector<1x128xi32>
    %c0_i32_3 = arith.constant 0 : i32
    %16 = arith.cmpi slt, %9, %c0_i32_3 : i32
    %17 = vector.broadcast %16 : i1 to vector<1x128xi1>
    %18 = vector.broadcast %17 : vector<1x128xi1> to vector<1x128xi1>
    %19 = arith.xori %15, %18 : vector<1x128xi1>
    %20 = arith.andi %19, %13 : vector<1x128xi1>
    %21 = vector.broadcast %9 : i32 to vector<1x128xi32>
    %22 = arith.addi %11, %21 : vector<1x128xi32>
    %23 = arith.select %20, %22, %11 : vector<1x128xi1>, vector<1x128xi32>
    %c1_i32_4 = arith.constant 1 : i32
    %24 = vector.broadcast %c1_i32_4 : i32 to vector<1x128xi32>
    %25 = arith.cmpi sge, %23, %24 : vector<1x128xi32>
    %c14_i32 = arith.constant 14 : i32
    %26 = vector.broadcast %c14_i32 : i32 to vector<1x128xi32>
    %27 = arith.cmpi sle, %23, %26 : vector<1x128xi32>
    %28 = vector.extract_strided_slice %4 {offsets = [0, 111], sizes = [4, 128], strides = [1, 1]} : vector<4x384xf32> to vector<4x128xf32>
    %29 = vector.extract_strided_slice %4 {offsets = [0, 127], sizes = [4, 128], strides = [1, 1]} : vector<4x384xf32> to vector<4x128xf32>
    %30 = vector.extract_strided_slice %4 {offsets = [0, 143], sizes = [4, 128], strides = [1, 1]} : vector<4x384xf32> to vector<4x128xf32>
    %31 = tpu.concatenate %28, %29, %30 in 0 : vector<4x128xf32>, vector<4x128xf32>, vector<4x128xf32> -> vector<12x128xf32>
    %cst = arith.constant 0.000000e+00 : f32
    %32 = vector.shape_cast %25 : vector<1x128xi1> to vector<1x128xi1>
    %33 = vector.broadcast %32 : vector<1x128xi1> to vector<12x128xi1>
    %34 = vector.broadcast %cst : f32 to vector<12x128xf32>
    %35 = arith.select %33, %31, %34 : vector<12x128xi1>, vector<12x128xf32>
    %36 = vector.extract_strided_slice %4 {offsets = [0, 112], sizes = [4, 128], strides = [1, 1]} : vector<4x384xf32> to vector<4x128xf32>
    %37 = vector.extract_strided_slice %4 {offsets = [0, 128], sizes = [4, 128], strides = [1, 1]} : vector<4x384xf32> to vector<4x128xf32>
    %38 = vector.extract_strided_slice %4 {offsets = [0, 144], sizes = [4, 128], strides = [1, 1]} : vector<4x384xf32> to vector<4x128xf32>
    %39 = tpu.concatenate %36, %37, %38 in 0 : vector<4x128xf32>, vector<4x128xf32>, vector<4x128xf32> -> vector<12x128xf32>
    %40 = vector.extract_strided_slice %4 {offsets = [0, 113], sizes = [4, 128], strides = [1, 1]} : vector<4x384xf32> to vector<4x128xf32>
    %41 = vector.extract_strided_slice %4 {offsets = [0, 129], sizes = [4, 128], strides = [1, 1]} : vector<4x384xf32> to vector<4x128xf32>
    %42 = vector.extract_strided_slice %4 {offsets = [0, 145], sizes = [4, 128], strides = [1, 1]} : vector<4x384xf32> to vector<4x128xf32>
    %43 = tpu.concatenate %40, %41, %42 in 0 : vector<4x128xf32>, vector<4x128xf32>, vector<4x128xf32> -> vector<12x128xf32>
    %cst_5 = arith.constant 0.000000e+00 : f32
    %44 = vector.shape_cast %27 : vector<1x128xi1> to vector<1x128xi1>
    %45 = vector.broadcast %44 : vector<1x128xi1> to vector<12x128xi1>
    %46 = vector.broadcast %cst_5 : f32 to vector<12x128xf32>
    %47 = arith.select %45, %43, %46 : vector<12x128xi1>, vector<12x128xf32>
    %48 = tpu.concatenate %35, %39, %47 in 0 : vector<12x128xf32>, vector<12x128xf32>, vector<12x128xf32> -> vector<36x128xf32>
    %c0_6 = arith.constant 0 : index
    %c0_7 = arith.constant 0 : index
    %49 = vector.load %arg3[%c0_6, %c0_7] : memref<8x36xf32, #tpu.memory_space<vmem>>, vector<8x36xf32>
    %cst_8 = arith.constant dense<0.000000e+00> : vector<8x128xf32>
    %50 = tpu.matmul %49, %48, %cst_8 {dimension_numbers = #tpu.dot_dimension_numbers<[1], [0], [0], [1], [0, 0, 1, 1], [], []>} : vector<8x36xf32>, vector<36x128xf32>, vector<8x128xf32> -> vector<8x128xf32>
    %c0_9 = arith.constant 0 : index
    %c0_10 = arith.constant 0 : index
    %51 = vector.load %arg4[%c0_9, %c0_10] : memref<8x1xf32, #tpu.memory_space<vmem>>, vector<8x1xf32>
    %52 = vector.broadcast %51 : vector<8x1xf32> to vector<8x128xf32>
    %53 = arith.addf %50, %52 : vector<8x128xf32>
    %c0_11 = arith.constant 0 : index
    %c0_12 = arith.constant 0 : index
    %c0_13 = arith.constant 0 : index
    %54 = vector.load %arg5[%c0_11, %c0_12, %c0_13] : memref<1x8x128xf32, #tpu.memory_space<vmem>>, vector<1x8x128xf32>
    %55 = vector.shape_cast %54 : vector<1x8x128xf32> to vector<8x128xf32>
    %56 = vector.shape_cast %53 : vector<8x128xf32> to vector<1x8x128xf32>
    tpu.vector_store %arg5[%c0_11, %c0_12, %c0_13], %56 {strides = array<i32>} : memref<1x8x128xf32, #tpu.memory_space<vmem>>, vector<1x8x128xf32>,
    return
  }
  func.func @transform_0(%arg0: i32, %arg1: i32) -> (i32, i32, i32) {
    %c0_i32 = arith.constant 0 : i32
    %c0_i32_0 = arith.constant 0 : i32
    %c0_i32_1 = arith.constant 0 : i32
    return %arg0, %c0_i32, %c0_i32_0 : i32, i32, i32
  }
  func.func @transform_1(%arg0: i32, %arg1: i32) -> (i32, i32) {
    %c0_i32 = arith.constant 0 : i32
    %c0_i32_0 = arith.constant 0 : i32
    %c0_i32_1 = arith.constant 0 : i32
    return %c0_i32, %c0_i32_0 : i32, i32
  }
  func.func @transform_2(%arg0: i32, %arg1: i32) -> (i32, i32) {
    %c0_i32 = arith.constant 0 : i32
    %c0_i32_0 = arith.constant 0 : i32
    %c0_i32_1 = arith.constant 0 : i32
    return %c0_i32, %c0_i32_0 : i32, i32
  }
  func.func @transform_3(%arg0: i32, %arg1: i32) -> (i32, i32, i32) {
    %c0_i32 = arith.constant 0 : i32
    %c0_i32_0 = arith.constant 0 : i32
    return %arg0, %c0_i32, %arg1 : i32, i32, i32
  }
}

</mosaic_0001>

<llo_original>
// kernel: tpu_custom_call.1
$region0: #{tpu_custom_call.1}
  #allocation0 [shape = 'u32[]', space=smem, size = 0x4, offset = 0x4, fixed_abs, tag = 'smem constant byte address 0x4 - core index']
  #allocation1 [shape = 'u32[144,128]{1,0:T(1,128)}', space=vmem, size = 0x12000, scoped, tag = 'internal scratch']
  %s0 = inlined_call_operand.hbm [shape: f32[2,4,512], index: 0, kind: input, shape index: {}]
  %s1 = inlined_call_operand.vmem [shape: f32[8,36], index: 1, kind: input, shape index: {}]
  %s2 = inlined_call_operand.vmem [shape: f32[8,1], index: 2, kind: input, shape index: {}]
  %s3 = inlined_call_operand.hbm [shape: f32[2,8,256], index: 3, kind: output, shape index: {}]
  %s4 = sld [smem:[#allocation0]]
  $region49: #{tpu_custom_call.1} parent=0
    _
  %s6 = ssub.s32 1, %s4
  %s7 = scalar_select 0, %s6, %s4
  $region1: #{tpu_custom_call.1} parent=0
    #allocation2 [shape = 'u8[16384]{0}', space=vmem, size = 0x4000, scoped, tag = 'input window, operand 0']
    #allocation3 [shape = 's32[2]{0}', space=sflag, size = 0x8, scoped, tag = 'scoped memory for tpu_custom_call.1']
    #allocation4 [shape = 's32[2]{0}', space=sflag, size = 0x8, scoped, tag = 'scoped memory for tpu_custom_call.1']
    #allocation5 [shape = 'u8[8192]{0}', space=vmem, size = 0x2000, scoped, tag = 'output window, operand 0']
    %8 = vsyncpa [#allocation3], 0
    %s9 = scalar_lea.sflag [#allocation3], 1
    %10 = vsyncpa %s9, 0
    %11 = vsyncpa [#allocation4], 0
    %s12 = scalar_lea.sflag [#allocation4], 1
    %13 = vsyncpa %s12, 0
    loop: start=0, step=1, limit=6
    $region2: #{tpu_custom_call.1} parent=1 // loop_pre_header
      _
    $region3: #{tpu_custom_call.1} parent=1 // loop_header
      %s15 = sphi 0, %s19
      %p16 = scmp.ge.s32.totalorder %s15, 6
      %s22 = sphi 0, %s34
      %s23 = sphi 0, %s30
      %s24 = sphi 0, %s22
      %s25 = sphi 0, %s23
      %s26 = sphi 0, %s24
      %s27 = sphi 0, %s25
      %s37 = sphi 0, %s39
      %s40 = sphi 0, %s37
      %s41 = sphi 0, %s40
      %s57 = sphi 0, %s41
      %s61 = sphi 0, %s61
      %s63 = sphi 0, %s61
      %s64 = sphi 0, %s63
      %s78 = sphi 0, %s64
      %s82 = sphi 0, %s82
      %s84 = sphi 0, %s82
      %s85 = sphi 0, %s84
      %s99 = sphi 0, %s85
      %s107 = sphi 0, %s109
      %s110 = sphi 0, %s107
      %s111 = sphi 0, %s110
      %s127 = sphi 0, %s111
    $region4: #{tpu_custom_call.1} parent=1 // loop_header_branch
      %18 = sbr.rel (%p16) target = $region8
    $region5: #{tpu_custom_call.1} parent=1 // loop_body
      %s20 = ssub.s32 %s15, 1
      %s21 = ssub.s32 %s15, 2
      %s28 = sadd.s32 1, %s23
      %p29 = scmp.ge.s32.totalorder %s28, 2
      %s30 = scalar_select %p29, 0, %s28
      %s31 = sadd.s32 1, %s22
      %s32 = scalar_select %p29, %s31, %s22
      %p33 = scmp.ge.s32.totalorder %s32, 2
      %s34 = scalar_select %p33, 0, %s32
      %s35 = ssub.s32 %s22, %s34
      %p36 = scmp.eq.s32.totalorder %s35, 0
      %s38 = sadd.s32 %s37, 1
      %s39 = scalar_select %p36, %s37, %s38
      %p42 = pneg %p36
      %p43 = scmp.eq.s32.totalorder %s15, 3
      %p44 = por %p42, %p43
      %p45 = scmp.ne.s32.totalorder %s37, %s40
      %p46 = scmp.eq.s32.totalorder %s15, 0
      %p47 = por %p45, %p46
      %p48 = scmp.ne.s32.totalorder %s37, %s40
      %p49 = scmp.eq.s32.totalorder %s20, 3
      %p50 = por %p48, %p49
      %p51 = scmp.ne.s32.totalorder %s40, %s41
      %p52 = scmp.eq.s32.totalorder %s20, 0
      %p53 = por %p51, %p52
      %p54 = scmp.ne.s32.totalorder %s40, %s41
      %p55 = scmp.eq.s32.totalorder %s21, 3
      %p56 = por %p54, %p55
      %p58 = scmp.ne.s32.totalorder %s41, %s57
      %p59 = scmp.eq.s32.totalorder %s21, 0
      %p60 = por %p58, %p59
      %s62 = sadd.s32 %s61, 1
      %p65 = scmp.eq.s32.totalorder %s15, 3
      %p66 = scmp.ne.s32.totalorder %s61, %s63
      %p67 = scmp.eq.s32.totalorder %s15, 0
      %p68 = por %p66, %p67
      %p69 = scmp.ne.s32.totalorder %s61, %s63
      %p70 = scmp.eq.s32.totalorder %s20, 3
      %p71 = por %p69, %p70
      %p72 = scmp.ne.s32.totalorder %s63, %s64
      %p73 = scmp.eq.s32.totalorder %s20, 0
      %p74 = por %p72, %p73
      %p75 = scmp.ne.s32.totalorder %s63, %s64
      %p76 = scmp.eq.s32.totalorder %s21, 3
      %p77 = por %p75, %p76
      %p79 = scmp.ne.s32.totalorder %s64, %s78
      %p80 = scmp.eq.s32.totalorder %s21, 0
      %p81 = por %p79, %p80
      %s83 = sadd.s32 %s82, 1
      %p86 = scmp.eq.s32.totalorder %s15, 3
      %p87 = scmp.ne.s32.totalorder %s82, %s84
      %p88 = scmp.eq.s32.totalorder %s15, 0
      %p89 = por %p87, %p88
      %p90 = scmp.ne.s32.totalorder %s82, %s84
      %p91 = scmp.eq.s32.totalorder %s20, 3
      %p92 = por %p90, %p91
      %p93 = scmp.ne.s32.totalorder %s84, %s85
      %p94 = scmp.eq.s32.totalorder %s20, 0
      %p95 = por %p93, %p94
      %p96 = scmp.ne.s32.totalorder %s84, %s85
      %p97 = scmp.eq.s32.totalorder %s21, 3
      %p98 = por %p96, %p97
      %p100 = scmp.ne.s32.totalorder %s85, %s99
      %p101 = scmp.eq.s32.totalorder %s21, 0
      %p102 = por %p100, %p101
      %s103 = ssub.s32 %s22, %s34
      %s104 = ssub.s32 %s23, %s30
      %s105 = sor.u32 %s103, %s104
      %p106 = scmp.eq.s32.totalorder %s105, 0
      %s108 = sadd.s32 %s107, 1
      %s109 = scalar_select %p106, %s107, %s108
      %p112 = pneg %p106
      %p113 = scmp.eq.s32.totalorder %s15, 3
      %p114 = por %p112, %p113
      %p115 = scmp.ne.s32.totalorder %s107, %s110
      %p116 = scmp.eq.s32.totalorder %s15, 0
      %p117 = por %p115, %p116
      %p118 = scmp.ne.s32.totalorder %s107, %s110
      %p119 = scmp.eq.s32.totalorder %s20, 3
      %p120 = por %p118, %p119
      %p121 = scmp.ne.s32.totalorder %s110, %s111
      %p122 = scmp.eq.s32.totalorder %s20, 0
      %p123 = por %p121, %p122
      %p124 = scmp.ne.s32.totalorder %s110, %s111
      %p125 = scmp.eq.s32.totalorder %s21, 3
      %p126 = por %p124, %p125
      %p128 = scmp.ne.s32.totalorder %s111, %s127
      %p129 = scmp.eq.s32.totalorder %s21, 0
      %p130 = por %p128, %p129
      %p131 = scmp.le.s32.totalorder 1, %s15
      %p132 = scmp.lt.s32.totalorder %s15, 5
      %p133 = pnand %p131, %p132
      %p134 = pneg %p133
      // Predicated region
      $region9: #{tpu_custom_call.1} parent=5 // pred_check
        _
      $region10: #{tpu_custom_call.1} parent=5 // pred_check_branch
        %136 = sbr.rel (%p133) target = $region12
      $region11: #{tpu_custom_call.1} parent=5 // pred_region
        %s137 = ssub.s32 %s15, 1
        // Predicated region
        $region13: #{tpu_custom_call.1} parent=11 // pred_check
          %p138 = pneg %p74
        $region14: #{tpu_custom_call.1} parent=11 // pred_check_branch
          %140 = sbr.rel (%p138) target = $region16
        $region15: #{tpu_custom_call.1} parent=11 // pred_region
          _
        $region16: #{tpu_custom_call.1} parent=11 // pred_fallthru
          _
        // Predicated region
        $region17: #{tpu_custom_call.1} parent=11 // pred_check
          %p141 = pneg %p95
        $region18: #{tpu_custom_call.1} parent=11 // pred_check_branch
          %143 = sbr.rel (%p141) target = $region20
        $region19: #{tpu_custom_call.1} parent=11 // pred_region
          _
        $region20: #{tpu_custom_call.1} parent=11 // pred_fallthru
          _
      $region12: #{tpu_custom_call.1} parent=5 // pred_fallthru
        _
      %p144 = scmp.lt.s32.totalorder %s15, 4
      // Predicated region
      $region21: #{tpu_custom_call.1} parent=5 // pred_check
        %p145 = pneg %p144
      $region22: #{tpu_custom_call.1} parent=5 // pred_check_branch
        %147 = sbr.rel (%p145) target = $region24
      $region23: #{tpu_custom_call.1} parent=5 // pred_region
        // Predicated region
        $region25: #{tpu_custom_call.1} parent=23 // pred_check
          %p148 = pneg %p47
        $region26: #{tpu_custom_call.1} parent=23 // pred_check_branch
          %150 = sbr.rel (%p148) target = $region28
        $region27: #{tpu_custom_call.1} parent=23 // pred_region
          %s151 = sand.u32 %s37, 1
          %s152 = scalar_lea.sflag [#allocation3], %s151
          %s153 = sand.u32 %s37, 1
          %s154 = smul.addr %s153, 16
          %s155 = scalar_lea.vmem [#allocation2], %s154
          %s157 = ssub.s32 256, 256
          %158 = vsyncadd %s152, %s157
          %s159 = smul.addr %s22, 4
          %s160 = smul.addr %s159, 64
          %s161 = scalar_lea.hbm %s0, %s160
          %s163 = sshll.u32 %s155, 4
          %s164 = int_to_ptr.vmem [resolvable:$true] %s163
          %166 = dma.hbm_to_vmem [thread:$0]  %s161, 256, %s164, %s152
        $region28: #{tpu_custom_call.1} parent=23 // pred_fallthru
          _
      $region24: #{tpu_custom_call.1} parent=5 // pred_fallthru
        _
      %p167 = scmp.le.s32.totalorder 1, %s15
      %p168 = scmp.lt.s32.totalorder %s15, 5
      %p169 = pnand %p167, %p168
      %p170 = pneg %p169
      // Predicated region
      $region29: #{tpu_custom_call.1} parent=5 // pred_check
        _
      $region30: #{tpu_custom_call.1} parent=5 // pred_check_branch
        %172 = sbr.rel (%p169) target = $region32
      $region31: #{tpu_custom_call.1} parent=5 // pred_region
        %s173 = ssub.s32 %s15, 1
        %s174 = sand.u32 %s40, 1
        %s175 = scalar_lea.sflag [#allocation3], %s174
        %s176 = sand.u32 %s40, 1
        %s177 = smul.addr %s176, 16
        %s178 = scalar_lea.vmem [#allocation2], %s177
        // Predicated region
        $region33: #{tpu_custom_call.1} parent=31 // pred_check
          %p179 = pneg %p53
        $region34: #{tpu_custom_call.1} parent=31 // pred_check_branch
          %181 = sbr.rel (%p179) target = $region36
        $region35: #{tpu_custom_call.1} parent=31 // pred_region
          %182 = dma.done %s175, 256
        $region36: #{tpu_custom_call.1} parent=31 // pred_fallthru
          _
        %s183 = sand.u32 %s40, 1
        %s184 = scalar_lea.sflag [#allocation3], %s183
        %s185 = sand.u32 %s40, 1
        %s186 = smul.addr %s185, 16
        %s187 = scalar_lea.vmem [#allocation2], %s186
        %p188 = pneg %p53
        %p189 = pneg %p50
        %p190 = pneg %p74
        %p191 = pneg %p71
        %p192 = pneg %p95
        %p193 = pneg %p92
        %p194 = pneg %p123
        %p195 = pneg %p120
        %s196 = sand.u32 %s110, 1
        %s197 = scalar_lea.sflag [#allocation4], %s196
        %s198 = sand.u32 %s110, 1
        %s199 = smul.addr %s198, 8
        %s200 = scalar_lea.vmem [#allocation5], %s199
        %s201 = smul.u32 %s25, 128
        %s202 = sshra.s32 %s201, 7
        %s203 = sand.u32 %s201, 127
        %s204 = smul.addr %s202, 4
        %s205 = scalar_lea.vmem %s178, %s204 [#allocation2]
        %v206 = vld [vmem:[%s205] sm:$0xff]
        %v207 = vld [vmem:[%s205 + $0x8] sm:$0xf]
        %v208 = vlaneseq
        %v209 = vand.u32 %v208, 127
        %v210 = vstv %s201
        %v211 = vadd.s32 %v210, %v209
        %vm212 = vcmp.lt.s32.totalorder %v211, 0
        %v213 = vsub.s32 0, %v211
        %v214 = vsel %vm212, %v213, %v211
        %v215 = vshrl.u32 %v214, 4
        %v216 = vand.u32 %v214, 15
        %v217 = vsub.s32 0, %v216
        %v218 = vsel %vm212, %v217, %v216
        %vm219 = vcmp.ne.s32.totalorder %v218, 0
        %vm220 = vcmp.lt.s32.totalorder %v218, 0
        %vm221 = vmand %vm220, %vm219
        %v222 = vadd.s32 %v218, 16
        %v223 = vsel %vm221, %v222, %v218
        %vm224 = vcmp.ge.s32.totalorder %v223, 1
        %vm225 = vcmp.le.s32.totalorder %v223, 14
        %v227 = vcombine.high %v206, %v206
        %v229 = vcombine.low %v206, %v206
        %230 = vrot.lane.b32.xlu0 %v229, 112
        %v231 = vpop.permute.xlu0 %230
        %232 = vrot.lane.b32.xlu0 %v206, 112
        %v233 = vpop.permute.xlu0 %232
        %vm234 = vcmask 916480
        %v235 = vsel %vm234, %v231, %v233
        %239 = vrot.lane.b32.xlu0 %v227, 96
        %v240 = vpop.permute.xlu0 %239
        %241 = vrot.lane.b32.xlu0 %v207, 96
        %v242 = vpop.permute.xlu0 %241
        %vm243 = vcmask 785408
        %v244 = vsel %vm243, %v240, %v242
        %vm245 = vcmask 1043456
        %v246 = vsel %vm245, %v206, %v235
        %v247 = vsel %vm245, %v227, %v233
        %v248 = vsel %vm224, 1, 0
        %vm249 = vcmp.eq.s32.totalorder %v248, 1
        %252 = vrot.lane.b32.xlu0 %v246, 17
        %v253 = vpop.permute.xlu0 %252
        %254 = vrot.lane.b32.xlu0 %v247, 17
        %v255 = vpop.permute.xlu0 %254
        %256 = vrot.lane.b32.xlu0 %v240, 17
        %v257 = vpop.permute.xlu0 %256
        %258 = vrot.lane.b32.xlu0 %v244, 17
        %v259 = vpop.permute.xlu0 %258
        %vm260 = vcmask 138240
        %v261 = vsel %vm260, %v253, %v255
        %v262 = vsel %vm260, %v257, %v259
        %v265 = vsel %vm249, %v261, 0.0
        %v266 = vsel %vm249, %v262, 0.0
        %v267 = vsel %vm245, %v206, %v233
        %v268 = vcombine.low %v207, %v207
        %269 = vrot.lane.b32.xlu0 %v268, 112
        %v270 = vpop.permute.xlu0 %269
        %v271 = vsel %vm234, %v233, %v270
        %v273 = vsel %vm245, %v227, %v271
        %v274 = vsel %vm225, 1, 0
        %vm275 = vcmp.eq.s32.totalorder %v274, 1
        %278 = vrot.lane.b32.xlu0 %v267, 15
        %v279 = vpop.permute.xlu0 %278
        %280 = vrot.lane.b32.xlu0 %v273, 15
        %v281 = vpop.permute.xlu0 %280
        %282 = vrot.lane.b32.xlu0 %v240, 15
        %v283 = vpop.permute.xlu0 %282
        %284 = vrot.lane.b32.xlu0 %v244, 15
        %v285 = vpop.permute.xlu0 %284
        %vm286 = vcmask 121856
        %v287 = vsel %vm286, %v279, %v281
        %v288 = vsel %vm286, %v283, %v285
        %v291 = vsel %vm275, %v287, 0.0
        %v292 = vsel %vm275, %v288, 0.0
        %v293 = vrot.slane %v267, 4
        %v294 = vrot.slane %v247, 4
        %v295 = vrot.slane %v240, 4
        %v296 = vsel %vm245, %v293, %v295
        %v297 = vrot.slane %v244, 4
        %v298 = vsel %vm245, %v294, %v297
        %299 = vrot.lane.b32.xlu0 %v293, 16
        %v300 = vpop.permute.xlu0 %299
        %301 = vrot.lane.b32.xlu0 %v294, 16
        %v302 = vpop.permute.xlu0 %301
        %303 = vrot.lane.b32.xlu0 %v296, 16
        %v304 = vpop.permute.xlu0 %303
        %305 = vrot.lane.b32.xlu0 %v298, 16
        %v306 = vpop.permute.xlu0 %305
        %vm307 = vcmask 130048
        %v308 = vsel %vm307, %v300, %v302
        %v309 = vsel %vm307, %v304, %v306
        %v312 = vsel %vm245, %v266, %v308
        %v313 = vld [vmem:[%s1] sm:$0xff]
        %v314 = vld [vmem:[%s2] sm:$0xff]
        %316 = vset.pattern.permute.xlu0 0
        %317 = vperm.xlu0 %316, %v314
        %v318 = vpop.permute.xlu0 %317
        %vm320 = vcmask 293888
        %v322 = vsel %vm320, %v313, 0
        %v325 = vsel %vm245, %v292, 0
        %327 = vmatprep.subr.mxu0 0.0
        %328 = vmatpush1.msra.mxu0 %v265
        %329 = vmatprep.subr.mxu0 0.0
        %330 = vmatpush1.msra.mxu0 %v312
        %331 = vmatprep.subr.mxu0 0.0
        %332 = vmatpush1.msra.mxu0 %v309
        %333 = vmatprep.subr.mxu0 0.0
        %334 = vmatpush1.msra.mxu0 %v291
        %335 = vmatprep.subr.mxu0 0.0
        %336 = vmatpush1.msra.mxu0 %v325
        %337 = vmatprep.subr.mxu0 0.0
        %338 = vmatpush1.msra.mxu0 0.0
        %339 = vmatprep.subr.mxu0 0.0
        %340 = vmatpush1.msra.mxu0 0.0
        %341 = vmatprep.subr.mxu0 0.0
        %342 = vmatpush1.msra.mxu0 0.0
        %343 = vmatprep.subr.mxu0 0.0
        %344 = vmatpush1.msra.mxu0 0.0
        %345 = vmatprep.subr.mxu0 0.0
        %346 = vmatpush1.msra.mxu0 0.0
        %347 = vmatprep.subr.mxu0 0.0
        %348 = vmatpush1.msra.mxu0 0.0
        %349 = vmatprep.subr.mxu0 0.0
        %350 = vmatpush1.msra.mxu0 0.0
        %351 = vmatprep.subr.mxu0 0.0
        %352 = vmatpush1.msra.mxu0 0.0
        %353 = vmatprep.subr.mxu0 0.0
        %354 = vmatpush1.msra.mxu0 0.0
        %355 = vmatprep.subr.mxu0 0.0
        %356 = vmatpush1.msra.mxu0 0.0
        %357 = vmatprep.subr.mxu0 0.0
        %358 = vmatpush1.msra.mxu0 0.0
        %359 = vmatprep.subr.mxu0 0.0
        %360 = vmatpush1.msra.mxu0 0.0
        %361 = vmatprep.subr.mxu0 0.0
        %362 = vmatpush1.msra.mxu0 0.0
        %363 = vmatprep.subr.mxu0 0.0
        %364 = vmatpush1.msra.mxu0 0.0
        %365 = vmatprep.subr.mxu0 0.0
        %366 = vmatpush1.msra.mxu0 0.0
        %367 = vmatprep.subr.mxu0 0.0
        %368 = vmatpush1.msra.mxu0 0.0
        %369 = vmatprep.subr.mxu0 0.0
        %370 = vmatpush1.msra.mxu0 0.0
        %371 = vmatprep.subr.mxu0 0.0
        %372 = vmatpush1.msra.mxu0 0.0
        %373 = vmatprep.subr.mxu0 0.0
        %374 = vmatpush1.msra.mxu0 0.0
        %375 = vmatprep.subr.mxu0 0.0
        %376 = vmatpush1.msra.mxu0 0.0
        %377 = vmatprep.subr.mxu0 0.0
        %378 = vmatpush1.msra.mxu0 0.0
        %379 = vmatprep.subr.mxu0 0.0
        %380 = vmatpush1.msra.mxu0 0.0
        %381 = vmatprep.subr.mxu0 0.0
        %382 = vmatpush1.msra.mxu0 0.0
        %383 = vmatprep.subr.mxu0 0.0
        %384 = vmatpush1.msra.mxu0 0.0
        %385 = vmatprep.subr.mxu0 0.0
        %386 = vmatpush1.msra.mxu0 0.0
        %387 = vmatprep.subr.mxu0 0.0
        %388 = vmatpush1.msra.mxu0 0.0
        %389 = vmatprep.subr.mxu0 0.0
        %390 = vmatpush1.msra.mxu0 0.0
        %391 = vmatprep.mubr.f32.mxu0 0.0
        %392 = vmatmul.mubr.f32.gmra.mrb[0].mxu0 %v322
        %v393 = vpop.f32.mrb[0].mxu0
        %v394 = vadd.f32 %v318, %v393
        %v395 = vpop.f32.mrb[0].mxu0
        %396 = vdwg.mxu0
        %397 = vst [vmem:[%s200] sm:$0xff] %v394
        %s398 = sand.u32 %s110, 1
        %s399 = scalar_lea.sflag [#allocation4], %s398
        %s400 = sand.u32 %s110, 1
        %s401 = smul.addr %s400, 8
        %s402 = scalar_lea.vmem [#allocation5], %s401
        // Predicated region
        $region37: #{tpu_custom_call.1} parent=31 // pred_check
          %p403 = pneg %p120
        $region38: #{tpu_custom_call.1} parent=31 // pred_check_branch
          %405 = sbr.rel (%p403) target = $region40
        $region39: #{tpu_custom_call.1} parent=31 // pred_region
          %s407 = ssub.s32 128, 128
          %408 = vsyncadd %s399, %s407
          %s409 = smul.addr %s24, 2
          %s410 = sadd.s32 %s25, %s409
          %s411 = smul.addr %s410, 128
          %s412 = scalar_lea.hbm %s3, %s411
          %s414 = sshll.u32 %s402, 4
          %s415 = int_to_ptr.vmem [resolvable:$true] %s414
          %417 = dma.vmem_to_hbm [thread:$0]  %s415, 128, %s412, %s399
        $region40: #{tpu_custom_call.1} parent=31 // pred_fallthru
          _
      $region32: #{tpu_custom_call.1} parent=5 // pred_fallthru
        _
      %p418 = scmp.le.s32.totalorder 2, %s15
      // Predicated region
      $region41: #{tpu_custom_call.1} parent=5 // pred_check
        %p419 = pneg %p418
      $region42: #{tpu_custom_call.1} parent=5 // pred_check_branch
        %421 = sbr.rel (%p419) target = $region44
      $region43: #{tpu_custom_call.1} parent=5 // pred_region
        %s422 = ssub.s32 %s15, 2
        // Predicated region
        $region45: #{tpu_custom_call.1} parent=43 // pred_check
          %p423 = pneg %p126
        $region46: #{tpu_custom_call.1} parent=43 // pred_check_branch
          %425 = sbr.rel (%p423) target = $region48
        $region47: #{tpu_custom_call.1} parent=43 // pred_region
          %s426 = sand.u32 %s111, 1
          %s427 = scalar_lea.sflag [#allocation4], %s426
          %s428 = sand.u32 %s111, 1
          %s429 = smul.addr %s428, 8
          %s430 = scalar_lea.vmem [#allocation5], %s429
          %431 = dma.done %s427, 128
        $region48: #{tpu_custom_call.1} parent=43 // pred_fallthru
          _
      $region44: #{tpu_custom_call.1} parent=5 // pred_fallthru
        _
    $region6: #{tpu_custom_call.1} parent=1 // loop_footer
      %s19 = sadd.s32 1, %s15
    $region7: #{tpu_custom_call.1} parent=1 // loop_footer_branch
      %14 = sbr.rel target = $region3
    $region8: #{tpu_custom_call.1} parent=1 // loop_exit
      _
    %432 = vsyncpa [#allocation3], 1
    %s433 = scalar_lea.sflag [#allocation3], 1
    %434 = vsyncpa %s433, 1
    %435 = vsyncpa [#allocation4], 1
    %s436 = scalar_lea.sflag [#allocation4], 1
    %437 = vsyncpa %s436, 1

</llo_original>
